<compile_context>
chip_gen: v5e
topology: v5e:2x2
jax: 0.10.0
libtpu: 0.0.40
codegen_flags: <defaults>
</compile_context>

<pallas_src>
import jax
import jax.numpy as jnp
from jax.experimental import pallas as pl
from jax.experimental.pallas import tpu as pltpu

_SUBLANES = 8


@jax.jit
def fool_conv2d(x, weight, bias):
    """x: [N, C, H, W] f32; weight: [OC, C, KH, KW] f32; bias: [OC] f32.
    Equivalent to torch.nn.Conv2d(C, OC, (KH, KW), stride=1, padding=0)."""
    N, C, H, W = x.shape
    OC, CC, KH, KW = weight.shape
    assert C == CC
    OH, OW = H - KH + 1, W - KW + 1
    HW = H * W
    # Flattened-spatial length covering every valid output position
    # p = oh*W + ow (the junk columns with ow >= OW are sliced off later).
    L = (OH - 1) * W + OW

    Cp = _SUBLANES                      # pad channels 3 -> 8 (aligned sublanes)

    # (N,C,H,W) -> (N,C,H*W) is metadata-only; channel pad is a tiny copy.
    x_flat = jnp.pad(x.reshape(N, C, HW), ((0, 0), (0, Cp - C), (0, 0)))
    # weight[oc, c, kh, kw] -> w_taps[kh*KW + kw, oc, c], channel-padded.
    w_taps = jnp.pad(weight.transpose(2, 3, 0, 1).reshape(KH * KW, OC, C),
                     ((0, 0), (0, 0), (0, Cp - C)))
    b2 = bias.reshape(OC, 1)

    def kernel(x_ref, w_ref, b_ref, o_ref):
        # x_ref: (Cp, HW)   w_ref: (KH*KW, OC, Cp)   b_ref: (OC, 1)
        # o_ref: (OC, L)    -- one image per grid step
        xi = x_ref[...]
        acc = jnp.zeros((OC, L), jnp.float32)
        for t in range(KH * KW):                       # static unroll: 9 taps
            kh, kw = divmod(t, KW)
            off = kh * W + kw
            # Tap = lane-shifted view of the flattened image (in-VMEM slice),
            # contracted against the (OC, Cp) tap weights on the MXU.
            acc = acc + jnp.dot(w_ref[t], xi[:, off:off + L],
                                preferred_element_type=jnp.float32)
        o_ref[...] = (acc + b_ref[...]).astype(o_ref.dtype)

    out_flat = pl.pallas_call(
        kernel,
        out_shape=jax.ShapeDtypeStruct((N, OC, L), x.dtype),
        grid=(N,),
        in_specs=[
            pl.BlockSpec((None, Cp, HW), lambda n: (n, 0, 0)),      # one image
            pl.BlockSpec((KH * KW, OC, Cp), lambda n: (0, 0, 0)),   # resident
            pl.BlockSpec((OC, 1), lambda n: (0, 0)),                # resident
        ],
        out_specs=pl.BlockSpec((None, OC, L), lambda n: (n, 0, 0)),
        compiler_params=pltpu.CompilerParams(
            dimension_semantics=("parallel",)),
    )(x_flat, w_taps, b2)

    # Strided-valid extraction back to NCHW: pad the last KW-1 columns, do a
    # metadata reshape, and drop the junk columns.  Fuses into one small copy
    # under jit -- the only post-kernel HBM round trip.
    out = jnp.pad(out_flat, ((0, 0), (0, 0), (0, OH * W - L)))
    return out.reshape(N, OC, OH, W)[:, :, :, :OW]


if __name__ == "__main__":
    key = jax.random.PRNGKey(0)
    kx, kw, kb, kx2 = jax.random.split(key, 4)

    # Module shapes: Conv2d(3, 32, 3) -> weight [32, 3, 3, 3], bias [32]
    N, C, H, W = 2, 3, 16, 16
    OC, KH, KW = 32, 3, 3

    x = jax.random.normal(kx, (N, C, H, W), dtype=jnp.float32)
    fan_in = C * KH * KW
    bound = 1.0 / (fan_in ** 0.5)
    weight = jax.random.uniform(kw, (OC, C, KH, KW), jnp.float32, -bound, bound)
    bias = jax.random.uniform(kb, (OC,), jnp.float32, -bound, bound)

    def ref_conv(x_, w_, b_):
        return jax.lax.conv_general_dilated(
            x_, w_, window_strides=(1, 1), padding="VALID",
            dimension_numbers=("NCHW", "OIHW", "NCHW")) + b_.reshape(1, -1, 1, 1)

    # Small input.
    y = jax.block_until_ready(fool_conv2d(x, weight, bias))
    assert y.shape == (N, OC, H - KH + 1, W - KW + 1)
    assert jnp.allclose(y, ref_conv(x, weight, bias), atol=1e-4, rtol=1e-4)

    # Larger spatial size (same code path; batch axis stays the parallel grid).
    H2 = W2 = 48
    x2 = jax.random.normal(kx2, (N, C, H2, W2), dtype=jnp.float32)
    y2 = jax.block_until_ready(fool_conv2d(x2, weight, bias))
    assert y2.shape == (N, OC, H2 - KH + 1, W2 - KW + 1)
    assert jnp.allclose(y2, ref_conv(x2, weight, bias), atol=1e-4, rtol=1e-4)

    print("KERNEL_OK")
</pallas_src>

<mosaic_0001>
module attributes {stable_mosaic.version = 11 : i64} {
  func.func @kernel(%arg0: i32, %arg1: memref<1x8x256xf32, #tpu.memory_space<vmem>>, %arg2: memref<9x32x8xf32, #tpu.memory_space<vmem>>, %arg3: memref<32x1xf32, #tpu.memory_space<vmem>>, %arg4: memref<1x32x222xf32, #tpu.memory_space<vmem>>) attributes {dimension_semantics = [#tpu.dimension_semantics<parallel>], iteration_bounds = array<i64: 2>, scalar_prefetch = 0 : i64, scratch_operands = 0 : i64, tpu.core_type = #tpu.core_type<tc>, window_params = [{transform_indices = @transform_0, window_bounds = array<i64: 1, 8, 256>}, {pipeline_mode = #tpu.pipeline_mode<synchronous>, transform_indices = @transform_1, window_bounds = array<i64: 9, 32, 8>}, {pipeline_mode = #tpu.pipeline_mode<synchronous>, transform_indices = @transform_2, window_bounds = array<i64: 32, 1>}, {transform_indices = @transform_3, window_bounds = array<i64: 1, 32, 222>}]} {
    %c0 = arith.constant 0 : index
    %c0_0 = arith.constant 0 : index
    %c0_1 = arith.constant 0 : index
    %0 = vector.load %arg1[%c0, %c0_0, %c0_1] : memref<1x8x256xf32, #tpu.memory_space<vmem>>, vector<1x8x256xf32>
    %1 = vector.shape_cast %0 : vector<1x8x256xf32> to vector<8x256xf32>
    %cst = arith.constant 0.000000e+00 : f32
    %2 = vector.broadcast %cst : f32 to vector<32x222xf32>
    %c0_2 = arith.constant 0 : index
    %c0_3 = arith.constant 0 : index
    %c0_4 = arith.constant 0 : index
    %3 = vector.load %arg2[%c0_2, %c0_3, %c0_4] : memref<9x32x8xf32, #tpu.memory_space<vmem>>, vector<1x32x8xf32>
    %4 = vector.shape_cast %3 : vector<1x32x8xf32> to vector<32x8xf32>
    %5 = vector.extract_strided_slice %1 {offsets = [0, 0], sizes = [8, 222], strides = [1, 1]} : vector<8x256xf32> to vector<8x222xf32>
    %cst_5 = arith.constant dense<0.000000e+00> : vector<32x222xf32>
    %6 = tpu.matmul %4, %5, %cst_5 {dimension_numbers = #tpu.dot_dimension_numbers<[1], [0], [0], [1], [0, 0, 1, 1], [], []>} : vector<32x8xf32>, vector<8x222xf32>, vector<32x222xf32> -> vector<32x222xf32>
    %7 = arith.addf %2, %6 : vector<32x222xf32>
    %c1 = arith.constant 1 : index
    %c0_6 = arith.constant 0 : index
    %c0_7 = arith.constant 0 : index
    %8 = vector.load %arg2[%c1, %c0_6, %c0_7] : memref<9x32x8xf32, #tpu.memory_space<vmem>>, vector<1x32x8xf32>
    %9 = vector.shape_cast %8 : vector<1x32x8xf32> to vector<32x8xf32>
    %10 = vector.extract_strided_slice %1 {offsets = [0, 1], sizes = [8, 222], strides = [1, 1]} : vector<8x256xf32> to vector<8x222xf32>
    %cst_8 = arith.constant dense<0.000000e+00> : vector<32x222xf32>
    %11 = tpu.matmul %9, %10, %cst_8 {dimension_numbers = #tpu.dot_dimension_numbers<[1], [0], [0], [1], [0, 0, 1, 1], [], []>} : vector<32x8xf32>, vector<8x222xf32>, vector<32x222xf32> -> vector<32x222xf32>
    %12 = arith.addf %7, %11 : vector<32x222xf32>
    %c2 = arith.constant 2 : index
    %c0_9 = arith.constant 0 : index
    %c0_10 = arith.constant 0 : index
    %13 = vector.load %arg2[%c2, %c0_9, %c0_10] : memref<9x32x8xf32, #tpu.memory_space<vmem>>, vector<1x32x8xf32>
    %14 = vector.shape_cast %13 : vector<1x32x8xf32> to vector<32x8xf32>
    %15 = vector.extract_strided_slice %1 {offsets = [0, 2], sizes = [8, 222], strides = [1, 1]} : vector<8x256xf32> to vector<8x222xf32>
    %cst_11 = arith.constant dense<0.000000e+00> : vector<32x222xf32>
    %16 = tpu.matmul %14, %15, %cst_11 {dimension_numbers = #tpu.dot_dimension_numbers<[1], [0], [0], [1], [0, 0, 1, 1], [], []>} : vector<32x8xf32>, vector<8x222xf32>, vector<32x222xf32> -> vector<32x222xf32>
    %17 = arith.addf %12, %16 : vector<32x222xf32>
    %c3 = arith.constant 3 : index
    %c0_12 = arith.constant 0 : index
    %c0_13 = arith.constant 0 : index
    %18 = vector.load %arg2[%c3, %c0_12, %c0_13] : memref<9x32x8xf32, #tpu.memory_space<vmem>>, vector<1x32x8xf32>
    %19 = vector.shape_cast %18 : vector<1x32x8xf32> to vector<32x8xf32>
    %20 = vector.extract_strided_slice %1 {offsets = [0, 16], sizes = [8, 222], strides = [1, 1]} : vector<8x256xf32> to vector<8x222xf32>
    %cst_14 = arith.constant dense<0.000000e+00> : vector<32x222xf32>
    %21 = tpu.matmul %19, %20, %cst_14 {dimension_numbers = #tpu.dot_dimension_numbers<[1], [0], [0], [1], [0, 0, 1, 1], [], []>} : vector<32x8xf32>, vector<8x222xf32>, vector<32x222xf32> -> vector<32x222xf32>
    %22 = arith.addf %17, %21 : vector<32x222xf32>
    %c4 = arith.constant 4 : index
    %c0_15 = arith.constant 0 : index
    %c0_16 = arith.constant 0 : index
    %23 = vector.load %arg2[%c4, %c0_15, %c0_16] : memref<9x32x8xf32, #tpu.memory_space<vmem>>, vector<1x32x8xf32>
    %24 = vector.shape_cast %23 : vector<1x32x8xf32> to vector<32x8xf32>
    %25 = vector.extract_strided_slice %1 {offsets = [0, 17], sizes = [8, 222], strides = [1, 1]} : vector<8x256xf32> to vector<8x222xf32>
    %cst_17 = arith.constant dense<0.000000e+00> : vector<32x222xf32>
    %26 = tpu.matmul %24, %25, %cst_17 {dimension_numbers = #tpu.dot_dimension_numbers<[1], [0], [0], [1], [0, 0, 1, 1], [], []>} : vector<32x8xf32>, vector<8x222xf32>, vector<32x222xf32> -> vector<32x222xf32>
    %27 = arith.addf %22, %26 : vector<32x222xf32>
    %c5 = arith.constant 5 : index
    %c0_18 = arith.constant 0 : index
    %c0_19 = arith.constant 0 : index
    %28 = vector.load %arg2[%c5, %c0_18, %c0_19] : memref<9x32x8xf32, #tpu.memory_space<vmem>>, vector<1x32x8xf32>
    %29 = vector.shape_cast %28 : vector<1x32x8xf32> to vector<32x8xf32>
    %30 = vector.extract_strided_slice %1 {offsets = [0, 18], sizes = [8, 222], strides = [1, 1]} : vector<8x256xf32> to vector<8x222xf32>
    %cst_20 = arith.constant dense<0.000000e+00> : vector<32x222xf32>
    %31 = tpu.matmul %29, %30, %cst_20 {dimension_numbers = #tpu.dot_dimension_numbers<[1], [0], [0], [1], [0, 0, 1, 1], [], []>} : vector<32x8xf32>, vector<8x222xf32>, vector<32x222xf32> -> vector<32x222xf32>
    %32 = arith.addf %27, %31 : vector<32x222xf32>
    %c6 = arith.constant 6 : index
    %c0_21 = arith.constant 0 : index
    %c0_22 = arith.constant 0 : index
    %33 = vector.load %arg2[%c6, %c0_21, %c0_22] : memref<9x32x8xf32, #tpu.memory_space<vmem>>, vector<1x32x8xf32>
    %34 = vector.shape_cast %33 : vector<1x32x8xf32> to vector<32x8xf32>
    %35 = vector.extract_strided_slice %1 {offsets = [0, 32], sizes = [8, 222], strides = [1, 1]} : vector<8x256xf32> to vector<8x222xf32>
    %cst_23 = arith.constant dense<0.000000e+00> : vector<32x222xf32>
    %36 = tpu.matmul %34, %35, %cst_23 {dimension_numbers = #tpu.dot_dimension_numbers<[1], [0], [0], [1], [0, 0, 1, 1], [], []>} : vector<32x8xf32>, vector<8x222xf32>, vector<32x222xf32> -> vector<32x222xf32>
    %37 = arith.addf %32, %36 : vector<32x222xf32>
    %c7 = arith.constant 7 : index
    %c0_24 = arith.constant 0 : index
    %c0_25 = arith.constant 0 : index
    %38 = vector.load %arg2[%c7, %c0_24, %c0_25] : memref<9x32x8xf32, #tpu.memory_space<vmem>>, vector<1x32x8xf32>
    %39 = vector.shape_cast %38 : vector<1x32x8xf32> to vector<32x8xf32>
    %40 = vector.extract_strided_slice %1 {offsets = [0, 33], sizes = [8, 222], strides = [1, 1]} : vector<8x256xf32> to vector<8x222xf32>
    %cst_26 = arith.constant dense<0.000000e+00> : vector<32x222xf32>
    %41 = tpu.matmul %39, %40, %cst_26 {dimension_numbers = #tpu.dot_dimension_numbers<[1], [0], [0], [1], [0, 0, 1, 1], [], []>} : vector<32x8xf32>, vector<8x222xf32>, vector<32x222xf32> -> vector<32x222xf32>
    %42 = arith.addf %37, %41 : vector<32x222xf32>
    %c8 = arith.constant 8 : index
    %c0_27 = arith.constant 0 : index
    %c0_28 = arith.constant 0 : index
    %43 = vector.load %arg2[%c8, %c0_27, %c0_28] : memref<9x32x8xf32, #tpu.memory_space<vmem>>, vector<1x32x8xf32>
    %44 = vector.shape_cast %43 : vector<1x32x8xf32> to vector<32x8xf32>
    %45 = vector.extract_strided_slice %1 {offsets = [0, 34], sizes = [8, 222], strides = [1, 1]} : vector<8x256xf32> to vector<8x222xf32>
    %cst_29 = arith.constant dense<0.000000e+00> : vector<32x222xf32>
    %46 = tpu.matmul %44, %45, %cst_29 {dimension_numbers = #tpu.dot_dimension_numbers<[1], [0], [0], [1], [0, 0, 1, 1], [], []>} : vector<32x8xf32>, vector<8x222xf32>, vector<32x222xf32> -> vector<32x222xf32>
    %47 = arith.addf %42, %46 : vector<32x222xf32>
    %c0_30 = arith.constant 0 : index
    %c0_31 = arith.constant 0 : index
    %48 = vector.load %arg3[%c0_30, %c0_31] : memref<32x1xf32, #tpu.memory_space<vmem>>, vector<32x1xf32>
    %49 = vector.broadcast %48 : vector<32x1xf32> to vector<32x222xf32>
    %50 = arith.addf %47, %49 : vector<32x222xf32>
    %c0_32 = arith.constant 0 : index
    %c0_33 = arith.constant 0 : index
    %c0_34 = arith.constant 0 : index
    %51 = vector.load %arg4[%c0_32, %c0_33, %c0_34] : memref<1x32x222xf32, #tpu.memory_space<vmem>>, vector<1x32x222xf32>
    %52 = vector.shape_cast %51 : vector<1x32x222xf32> to vector<32x222xf32>
    %53 = vector.shape_cast %50 : vector<32x222xf32> to vector<1x32x222xf32>
    tpu.vector_store %arg4[%c0_32, %c0_33, %c0_34], %53 {strides = array<i32>} : memref<1x32x222xf32, #tpu.memory_space<vmem>>, vector<1x32x222xf32>,
    return
  }
  func.func @transform_0(%arg0: i32) -> (i32, i32, i32) {
    %c0_i32 = arith.constant 0 : i32
    %c0_i32_0 = arith.constant 0 : i32
    %c0_i32_1 = arith.constant 0 : i32
    return %arg0, %c0_i32, %c0_i32_0 : i32, i32, i32
  }
  func.func @transform_1(%arg0: i32) -> (i32, i32, i32) {
    %c0_i32 = arith.constant 0 : i32
    %c0_i32_0 = arith.constant 0 : i32
    %c0_i32_1 = arith.constant 0 : i32
    %c0_i32_2 = arith.constant 0 : i32
    return %c0_i32, %c0_i32_0, %c0_i32_1 : i32, i32, i32
  }
  func.func @transform_2(%arg0: i32) -> (i32, i32) {
    %c0_i32 = arith.constant 0 : i32
    %c0_i32_0 = arith.constant 0 : i32
    %c0_i32_1 = arith.constant 0 : i32
    return %c0_i32, %c0_i32_0 : i32, i32
  }
  func.func @transform_3(%arg0: i32) -> (i32, i32, i32) {
    %c0_i32 = arith.constant 0 : i32
    %c0_i32_0 = arith.constant 0 : i32
    %c0_i32_1 = arith.constant 0 : i32
    return %arg0, %c0_i32, %c0_i32_0 : i32, i32, i32
  }
}

</mosaic_0001>

<llo_original>
// kernel: fool_conv2d.1
$region0: #{fool_conv2d.1}
  #allocation0 [shape = 'u32[]', space=smem, size = 0x4, offset = 0x4, fixed_abs, tag = 'smem constant byte address 0x4 - core index']
  #allocation1 [shape = 'u32[72,128]{1,0:T(1,128)}', space=vmem, size = 0x9000, scoped, tag = 'internal scratch']
  %s0 = inlined_call_operand.vmem [shape: f32[2,8,256], index: 0, kind: input, shape index: {}]
  %s1 = inlined_call_operand.vmem [shape: f32[9,32,8], index: 1, kind: input, shape index: {}]
  %s2 = inlined_call_operand.vmem [shape: f32[32,1], index: 2, kind: input, shape index: {}]
  %s3 = inlined_call_operand.vmem [shape: f32[2,32,222], index: 3, kind: output, shape index: {}]
  %s4 = sld [smem:[#allocation0]]
  $region45: #{fool_conv2d.1} parent=0
    _
  %s6 = ssub.s32 1, %s4
  %s7 = scalar_select 0, %s6, %s4
  loop: start=0, step=1, limit=4
  $region2: #{fool_conv2d.1} parent=0 // loop_pre_header
    _
  $region3: #{fool_conv2d.1} parent=0 // loop_header
    %s9 = sphi 0, %s13
    %p10 = scmp.ge.s32.totalorder %s9, 4
    %s19 = sphi 0, %s21
    %s22 = sphi 0, %s19
    %s23 = sphi 0, %s22
    %s39 = sphi 0, %s23
    %s43 = sphi 0, %s43
    %s45 = sphi 0, %s43
    %s46 = sphi 0, %s45
    %s60 = sphi 0, %s46
    %s64 = sphi 0, %s64
    %s66 = sphi 0, %s64
    %s67 = sphi 0, %s66
    %s81 = sphi 0, %s67
    %s87 = sphi 0, %s89
    %s90 = sphi 0, %s87
    %s91 = sphi 0, %s90
    %s107 = sphi 0, %s91
  $region4: #{fool_conv2d.1} parent=0 // loop_header_branch
    %12 = sbr.rel (%p10) target = $region8
  $region5: #{fool_conv2d.1} parent=0 // loop_body
    %s14 = ssub.s32 %s9, 1
    %s15 = ssub.s32 %s9, 2
    %s16 = sadd.s32 %s9, 1
    %s17 = ssub.s32 %s9, %s16
    %p18 = scmp.eq.s32.totalorder %s17, 0
    %s20 = sadd.s32 %s19, 1
    %s21 = scalar_select %p18, %s19, %s20
    %p24 = pneg %p18
    %p25 = scmp.eq.s32.totalorder %s9, 1
    %p26 = por %p24, %p25
    %p27 = scmp.ne.s32.totalorder %s19, %s22
    %p28 = scmp.eq.s32.totalorder %s9, 0
    %p29 = por %p27, %p28
    %p30 = scmp.ne.s32.totalorder %s19, %s22
    %p31 = scmp.eq.s32.totalorder %s14, 1
    %p32 = por %p30, %p31
    %p33 = scmp.ne.s32.totalorder %s22, %s23
    %p34 = scmp.eq.s32.totalorder %s14, 0
    %p35 = por %p33, %p34
    %p36 = scmp.ne.s32.totalorder %s22, %s23
    %p37 = scmp.eq.s32.totalorder %s15, 1
    %p38 = por %p36, %p37
    %p40 = scmp.ne.s32.totalorder %s23, %s39
    %p41 = scmp.eq.s32.totalorder %s15, 0
    %p42 = por %p40, %p41
    %s44 = sadd.s32 %s43, 1
    %p47 = scmp.eq.s32.totalorder %s9, 1
    %p48 = scmp.ne.s32.totalorder %s43, %s45
    %p49 = scmp.eq.s32.totalorder %s9, 0
    %p50 = por %p48, %p49
    %p51 = scmp.ne.s32.totalorder %s43, %s45
    %p52 = scmp.eq.s32.totalorder %s14, 1
    %p53 = por %p51, %p52
    %p54 = scmp.ne.s32.totalorder %s45, %s46
    %p55 = scmp.eq.s32.totalorder %s14, 0
    %p56 = por %p54, %p55
    %p57 = scmp.ne.s32.totalorder %s45, %s46
    %p58 = scmp.eq.s32.totalorder %s15, 1
    %p59 = por %p57, %p58
    %p61 = scmp.ne.s32.totalorder %s46, %s60
    %p62 = scmp.eq.s32.totalorder %s15, 0
    %p63 = por %p61, %p62
    %s65 = sadd.s32 %s64, 1
    %p68 = scmp.eq.s32.totalorder %s9, 1
    %p69 = scmp.ne.s32.totalorder %s64, %s66
    %p70 = scmp.eq.s32.totalorder %s9, 0
    %p71 = por %p69, %p70
    %p72 = scmp.ne.s32.totalorder %s64, %s66
    %p73 = scmp.eq.s32.totalorder %s14, 1
    %p74 = por %p72, %p73
    %p75 = scmp.ne.s32.totalorder %s66, %s67
    %p76 = scmp.eq.s32.totalorder %s14, 0
    %p77 = por %p75, %p76
    %p78 = scmp.ne.s32.totalorder %s66, %s67
    %p79 = scmp.eq.s32.totalorder %s15, 1
    %p80 = por %p78, %p79
    %p82 = scmp.ne.s32.totalorder %s67, %s81
    %p83 = scmp.eq.s32.totalorder %s15, 0
    %p84 = por %p82, %p83
    %s85 = ssub.s32 %s9, %s16
    %p86 = scmp.eq.s32.totalorder %s85, 0
    %s88 = sadd.s32 %s87, 1
    %s89 = scalar_select %p86, %s87, %s88
    %p92 = pneg %p86
    %p93 = scmp.eq.s32.totalorder %s9, 1
    %p94 = por %p92, %p93
    %p95 = scmp.ne.s32.totalorder %s87, %s90
    %p96 = scmp.eq.s32.totalorder %s9, 0
    %p97 = por %p95, %p96
    %p98 = scmp.ne.s32.totalorder %s87, %s90
    %p99 = scmp.eq.s32.totalorder %s14, 1
    %p100 = por %p98, %p99
    %p101 = scmp.ne.s32.totalorder %s90, %s91
    %p102 = scmp.eq.s32.totalorder %s14, 0
    %p103 = por %p101, %p102
    %p104 = scmp.ne.s32.totalorder %s90, %s91
    %p105 = scmp.eq.s32.totalorder %s15, 1
    %p106 = por %p104, %p105
    %p108 = scmp.ne.s32.totalorder %s91, %s107
    %p109 = scmp.eq.s32.totalorder %s15, 0
    %p110 = por %p108, %p109
    %p111 = scmp.le.s32.totalorder 1, %s9
    %p112 = scmp.lt.s32.totalorder %s9, 3
    %p113 = pnand %p111, %p112
    %p114 = pneg %p113
    // Predicated region
    $region9: #{fool_conv2d.1} parent=5 // pred_check
      _
    $region10: #{fool_conv2d.1} parent=5 // pred_check_branch
      %116 = sbr.rel (%p113) target = $region12
    $region11: #{fool_conv2d.1} parent=5 // pred_region
      %s117 = ssub.s32 %s9, 1
      // Predicated region
      $region13: #{fool_conv2d.1} parent=11 // pred_check
        %p118 = pneg %p56
      $region14: #{fool_conv2d.1} parent=11 // pred_check_branch
        %120 = sbr.rel (%p118) target = $region16
      $region15: #{fool_conv2d.1} parent=11 // pred_region
        _
      $region16: #{fool_conv2d.1} parent=11 // pred_fallthru
        _
      // Predicated region
      $region17: #{fool_conv2d.1} parent=11 // pred_check
        %p121 = pneg %p77
      $region18: #{fool_conv2d.1} parent=11 // pred_check_branch
        %123 = sbr.rel (%p121) target = $region20
      $region19: #{fool_conv2d.1} parent=11 // pred_region
        _
      $region20: #{fool_conv2d.1} parent=11 // pred_fallthru
        _
    $region12: #{fool_conv2d.1} parent=5 // pred_fallthru
      _
    %p124 = scmp.lt.s32.totalorder %s9, 2
    // Predicated region
    $region21: #{fool_conv2d.1} parent=5 // pred_check
      %p125 = pneg %p124
    $region22: #{fool_conv2d.1} parent=5 // pred_check_branch
      %127 = sbr.rel (%p125) target = $region24
    $region23: #{fool_conv2d.1} parent=5 // pred_region
      // Predicated region
      $region25: #{fool_conv2d.1} parent=23 // pred_check
        %p128 = pneg %p29
      $region26: #{fool_conv2d.1} parent=23 // pred_check_branch
        %130 = sbr.rel (%p128) target = $region28
      $region27: #{fool_conv2d.1} parent=23 // pred_region
        %p131 = scmp.lt.s32.totalorder %s9, 1
        %s132 = scalar_select %p131, %s9, 1
        %s133 = smul.addr %s132, 2
        %s134 = smul.addr %s133, 8
        %s135 = scalar_lea.vmem %s0, %s134
      $region28: #{fool_conv2d.1} parent=23 // pred_fallthru
        _
    $region24: #{fool_conv2d.1} parent=5 // pred_fallthru
      _
    %p136 = scmp.le.s32.totalorder 1, %s9
    %p137 = scmp.lt.s32.totalorder %s9, 3
    %p138 = pnand %p136, %p137
    %p139 = pneg %p138
    // Predicated region
    $region29: #{fool_conv2d.1} parent=5 // pred_check
      _
    $region30: #{fool_conv2d.1} parent=5 // pred_check_branch
      %141 = sbr.rel (%p138) target = $region32
    $region31: #{fool_conv2d.1} parent=5 // pred_region
      %s142 = ssub.s32 %s9, 1
      %p143 = scmp.lt.s32.totalorder %s14, 1
      %s144 = scalar_select %p143, %s14, 1
      %s145 = smul.addr %s144, 2
      %s146 = smul.addr %s145, 8
      %s147 = scalar_lea.vmem %s0, %s146
      %p148 = pneg %p35
      %p149 = pneg %p32
      %p150 = pneg %p56
      %p151 = pneg %p53
      %p152 = pneg %p77
      %p153 = pneg %p74
      %p154 = pneg %p103
      %p155 = pneg %p100
      %p156 = scmp.lt.s32.totalorder %s14, 1
      %s157 = scalar_select %p156, %s14, 1
      %s158 = smul.addr %s157, 8
      %s159 = smul.addr %s158, 8
      %s160 = scalar_lea.vmem %s3, %s159
      %p161 = scmp.lt.s32.totalorder %s14, 1
      %s162 = scalar_select %p161, %s14, 1
      %s163 = smul.addr %s162, 2
      %s164 = smul.addr %s163, 8
      %s165 = scalar_lea.vmem %s0, %s164
      %p166 = scmp.lt.s32.totalorder %s14, 1
      %s167 = scalar_select %p166, %s14, 1
      %s168 = smul.addr %s167, 8
      %s169 = smul.addr %s168, 8
      %s170 = scalar_lea.vmem %s3, %s169
      %v171 = vld [vmem:[%s165] sm:$0xff]
      %v172 = vld [vmem:[%s165 + $0x8] sm:$0xff]
      %v173 = vld [vmem:[%s1] sm:$0xff]
      %v174 = vld [vmem:[%s1 + $0x8] sm:$0xff]
      %v175 = vld [vmem:[%s1 + $0x10] sm:$0xff]
      %v176 = vld [vmem:[%s1 + $0x18] sm:$0xff]
      %s177 = scalar_lea.vmem %s1, 32
      %v178 = vld [vmem:[%s177] sm:$0xff]
      %v179 = vld [vmem:[%s177 + $0x8] sm:$0xff]
      %v180 = vld [vmem:[%s177 + $0x10] sm:$0xff]
      %v181 = vld [vmem:[%s177 + $0x18] sm:$0xff]
      %184 = vrot.lane.b32.xlu0 %v171, 127
      %v185 = vpop.permute.xlu0 %184
      %186 = vrot.lane.b32.xlu0 %v172, 127
      %v187 = vpop.permute.xlu0 %186
      %vm188 = vcmask 1039360
      %v189 = vsel %vm188, %v185, %v187
      %vm192 = vcmask 64512
      %v194 = vsel %vm192, %v178, 0
      %v197 = vsel %vm192, %v179, 0
      %v200 = vsel %vm192, %v180, 0
      %v203 = vsel %vm192, %v181, 0
      %205 = vmatpush.msra.mxu0 0.0
      %206 = vmatpush.msra.mxu0 0.0
      %207 = vmatpush.msra.mxu0 0.0
      %208 = vmatpush.msra.mxu0 0.0
      %209 = vmatpush.msra.mxu0 0.0
      %210 = vmatpush.msra.mxu0 0.0
      %211 = vmatpush.msra.mxu0 0.0
      %212 = vmatpush.msra.mxu0 0.0
      %213 = vmatpush.msra.mxu0 0.0
      %214 = vmatpush.msra.mxu0 0.0
      %215 = vmatpush.msra.mxu0 0.0
      %216 = vmatpush.msra.mxu0 0.0
      %217 = vmatpush.msra.mxu0 0.0
      %218 = vmatpush.msra.mxu0 0.0
      %219 = vmatpush.msra.mxu0 0.0
      %220 = vmatpush.msra.mxu0 %v189
      %221 = vmatmul.f32.gmra.mxu0 %v194
      %v222 = vpop.f32.mrf.mxu0
      %v223 = vadd.f32 0.0, %v222
      %224 = vmatmul.f32.gmra.mxu0 %v197
      %v225 = vpop.f32.mrf.mxu0
      %v226 = vadd.f32 0.0, %v225
      %227 = vmatmul.f32.gmra.mxu0 %v200
      %v228 = vpop.f32.mrf.mxu0
      %v229 = vadd.f32 0.0, %v228
      %230 = vmatmul.f32.gmra.mxu0 %v203
      %v231 = vpop.f32.mrf.mxu0
      %v232 = vadd.f32 0.0, %v231
      %233 = vdwg.mxu0
      %234 = vmatpush.msra.mxu0 0.0
      %235 = vmatpush.msra.mxu0 0.0
      %236 = vmatpush.msra.mxu0 0.0
      %237 = vmatpush.msra.mxu0 0.0
      %238 = vmatpush.msra.mxu0 0.0
      %239 = vmatpush.msra.mxu0 0.0
      %240 = vmatpush.msra.mxu0 0.0
      %241 = vmatpush.msra.mxu0 0.0
      %242 = vmatpush.msra.mxu0 0.0
      %243 = vmatpush.msra.mxu0 0.0
      %244 = vmatpush.msra.mxu0 0.0
      %245 = vmatpush.msra.mxu0 0.0
      %246 = vmatpush.msra.mxu0 0.0
      %247 = vmatpush.msra.mxu0 0.0
      %248 = vmatpush.msra.mxu0 0.0
      %249 = vmatpush.msra.mxu0 %v187
      %250 = vmatmul.f32.gmra.mxu0 %v194
      %v251 = vpop.f32.mrf.mxu0
      %v252 = vadd.f32 0.0, %v251
      %253 = vmatmul.f32.gmra.mxu0 %v197
      %v254 = vpop.f32.mrf.mxu0
      %v255 = vadd.f32 0.0, %v254
      %256 = vmatmul.f32.gmra.mxu0 %v200
      %v257 = vpop.f32.mrf.mxu0
      %v258 = vadd.f32 0.0, %v257
      %259 = vmatmul.f32.gmra.mxu0 %v203
      %v260 = vpop.f32.mrf.mxu0
      %v261 = vadd.f32 0.0, %v260
      %262 = vdwg.mxu0
      %v264 = vsel %vm192, %v173, 0
      %v267 = vsel %vm192, %v174, 0
      %v270 = vsel %vm192, %v175, 0
      %v273 = vsel %vm192, %v176, 0
      %275 = vmatpush.msra.mxu0 0.0
      %276 = vmatpush.msra.mxu0 0.0
      %277 = vmatpush.msra.mxu0 0.0
      %278 = vmatpush.msra.mxu0 0.0
      %279 = vmatpush.msra.mxu0 0.0
      %280 = vmatpush.msra.mxu0 0.0
      %281 = vmatpush.msra.mxu0 0.0
      %282 = vmatpush.msra.mxu0 0.0
      %283 = vmatpush.msra.mxu0 0.0
      %284 = vmatpush.msra.mxu0 0.0
      %285 = vmatpush.msra.mxu0 0.0
      %286 = vmatpush.msra.mxu0 0.0
      %287 = vmatpush.msra.mxu0 0.0
      %288 = vmatpush.msra.mxu0 0.0
      %289 = vmatpush.msra.mxu0 0.0
      %290 = vmatpush.msra.mxu0 %v171
      %291 = vmatmul.f32.gmra.mxu0 %v264
      %v292 = vpop.f32.mrf.mxu0
      %v293 = vadd.f32 %v223, %v292
      %294 = vmatmul.f32.gmra.mxu0 %v267
      %v295 = vpop.f32.mrf.mxu0
      %v296 = vadd.f32 %v226, %v295
      %297 = vmatmul.f32.gmra.mxu0 %v270
      %v298 = vpop.f32.mrf.mxu0
      %v299 = vadd.f32 %v229, %v298
      %300 = vmatmul.f32.gmra.mxu0 %v273
      %v301 = vpop.f32.mrf.mxu0
      %v302 = vadd.f32 %v232, %v301
      %303 = vdwg.mxu0
      %304 = vmatpush.msra.mxu0 0.0
      %305 = vmatpush.msra.mxu0 0.0
      %306 = vmatpush.msra.mxu0 0.0
      %307 = vmatpush.msra.mxu0 0.0
      %308 = vmatpush.msra.mxu0 0.0
      %309 = vmatpush.msra.mxu0 0.0
      %310 = vmatpush.msra.mxu0 0.0
      %311 = vmatpush.msra.mxu0 0.0
      %312 = vmatpush.msra.mxu0 0.0
      %313 = vmatpush.msra.mxu0 0.0
      %314 = vmatpush.msra.mxu0 0.0
      %315 = vmatpush.msra.mxu0 0.0
      %316 = vmatpush.msra.mxu0 0.0
      %317 = vmatpush.msra.mxu0 0.0
      %318 = vmatpush.msra.mxu0 0.0
      %319 = vmatpush.msra.mxu0 %v172
      %320 = vmatmul.f32.gmra.mxu0 %v264
      %v321 = vpop.f32.mrf.mxu0
      %v322 = vadd.f32 %v252, %v321
      %323 = vmatmul.f32.gmra.mxu0 %v267
      %v324 = vpop.f32.mrf.mxu0
      %v325 = vadd.f32 %v255, %v324
      %326 = vmatmul.f32.gmra.mxu0 %v270
      %v327 = vpop.f32.mrf.mxu0
      %v328 = vadd.f32 %v258, %v327
      %329 = vmatmul.f32.gmra.mxu0 %v273
      %v330 = vpop.f32.mrf.mxu0
      %v331 = vadd.f32 %v261, %v330
      %332 = vdwg.mxu0
      %s333 = scalar_lea.vmem %s1, 64
      %v334 = vld [vmem:[%s333] sm:$0xff]
      %v335 = vld [vmem:[%s333 + $0x8] sm:$0xff]
      %v336 = vld [vmem:[%s333 + $0x10] sm:$0xff]
      %v337 = vld [vmem:[%s333 + $0x18] sm:$0xff]
      %338 = vrot.lane.b32.xlu0 %v171, 126
      %v339 = vpop.permute.xlu0 %338
      %340 = vrot.lane.b32.xlu0 %v172, 126
      %v341 = vpop.permute.xlu0 %340
      %vm342 = vcmask 1031168
      %v343 = vsel %vm342, %v339, %v341
      %v347 = vsel %vm192, %v334, 0
      %v350 = vsel %vm192, %v335, 0
      %v353 = vsel %vm192, %v336, 0
      %v356 = vsel %vm192, %v337, 0
      %358 = vmatpush.msra.mxu0 0.0
      %359 = vmatpush.msra.mxu0 0.0
      %360 = vmatpush.msra.mxu0 0.0
      %361 = vmatpush.msra.mxu0 0.0
      %362 = vmatpush.msra.mxu0 0.0
      %363 = vmatpush.msra.mxu0 0.0
      %364 = vmatpush.msra.mxu0 0.0
      %365 = vmatpush.msra.mxu0 0.0
      %366 = vmatpush.msra.mxu0 0.0
      %367 = vmatpush.msra.mxu0 0.0
      %368 = vmatpush.msra.mxu0 0.0
      %369 = vmatpush.msra.mxu0 0.0
      %370 = vmatpush.msra.mxu0 0.0
      %371 = vmatpush.msra.mxu0 0.0
      %372 = vmatpush.msra.mxu0 0.0
      %373 = vmatpush.msra.mxu0 %v343
      %374 = vmatmul.f32.gmra.mxu0 %v347
      %v375 = vpop.f32.mrf.mxu0
      %v376 = vadd.f32 0.0, %v375
      %377 = vmatmul.f32.gmra.mxu0 %v350
      %v378 = vpop.f32.mrf.mxu0
      %v379 = vadd.f32 0.0, %v378
      %380 = vmatmul.f32.gmra.mxu0 %v353
      %v381 = vpop.f32.mrf.mxu0
      %v382 = vadd.f32 0.0, %v381
      %383 = vmatmul.f32.gmra.mxu0 %v356
      %v384 = vpop.f32.mrf.mxu0
      %v385 = vadd.f32 0.0, %v384
      %386 = vdwg.mxu0
      %387 = vmatpush.msra.mxu0 0.0
      %388 = vmatpush.msra.mxu0 0.0
      %389 = vmatpush.msra.mxu0 0.0
      %390 = vmatpush.msra.mxu0 0.0
      %391 = vmatpush.msra.mxu0 0.0
      %392 = vmatpush.msra.mxu0 0.0
      %393 = vmatpush.msra.mxu0 0.0
      %394 = vmatpush.msra.mxu0 0.0
      %395 = vmatpush.msra.mxu0 0.0
      %396 = vmatpush.msra.mxu0 0.0
      %397 = vmatpush.msra.mxu0 0.0
      %398 = vmatpush.msra.mxu0 0.0
      %399 = vmatpush.msra.mxu0 0.0
      %400 = vmatpush.msra.mxu0 0.0
      %401 = vmatpush.msra.mxu0 0.0
      %402 = vmatpush.msra.mxu0 %v341
      %403 = vmatmul.f32.gmra.mxu0 %v347
      %v404 = vpop.f32.mrf.mxu0
      %v405 = vadd.f32 0.0, %v404
      %406 = vmatmul.f32.gmra.mxu0 %v350
      %v407 = vpop.f32.mrf.mxu0
      %v408 = vadd.f32 0.0, %v407
      %409 = vmatmul.f32.gmra.mxu0 %v353
      %v410 = vpop.f32.mrf.mxu0
      %v411 = vadd.f32 0.0, %v410
      %412 = vmatmul.f32.gmra.mxu0 %v356
      %v413 = vpop.f32.mrf.mxu0
      %v414 = vadd.f32 0.0, %v413
      %415 = vdwg.mxu0
      %v416 = vadd.f32 %v293, %v376
      %v417 = vadd.f32 %v322, %v405
      %v418 = vadd.f32 %v296, %v379
      %v419 = vadd.f32 %v325, %v408
      %v420 = vadd.f32 %v299, %v382
      %v421 = vadd.f32 %v328, %v411
      %v422 = vadd.f32 %v302, %v385
      %v423 = vadd.f32 %v331, %v414
      %s424 = scalar_lea.vmem %s1, 96
      %v425 = vld [vmem:[%s424] sm:$0xff]
      %v426 = vld [vmem:[%s424 + $0x8] sm:$0xff]
      %v427 = vld [vmem:[%s424 + $0x10] sm:$0xff]
      %v428 = vld [vmem:[%s424 + $0x18] sm:$0xff]
      %429 = vrot.lane.b32.xlu0 %v171, 112
      %v430 = vpop.permute.xlu0 %429
      %431 = vrot.lane.b32.xlu0 %v172, 112
      %v432 = vpop.permute.xlu0 %431
      %vm433 = vcmask 916480
      %v434 = vsel %vm433, %v430, %v432
      %v438 = vsel %vm192, %v425, 0
      %v441 = vsel %vm192, %v426, 0
      %v444 = vsel %vm192, %v427, 0
      %v447 = vsel %vm192, %v428, 0
      %449 = vmatpush.msra.mxu0 0.0
      %450 = vmatpush.msra.mxu0 0.0
      %451 = vmatpush.msra.mxu0 0.0
      %452 = vmatpush.msra.mxu0 0.0
      %453 = vmatpush.msra.mxu0 0.0
      %454 = vmatpush.msra.mxu0 0.0
      %455 = vmatpush.msra.mxu0 0.0
      %456 = vmatpush.msra.mxu0 0.0
      %457 = vmatpush.msra.mxu0 0.0
      %458 = vmatpush.msra.mxu0 0.0
      %459 = vmatpush.msra.mxu0 0.0
      %460 = vmatpush.msra.mxu0 0.0
      %461 = vmatpush.msra.mxu0 0.0
      %462 = vmatpush.msra.mxu0 0.0
      %463 = vmatpush.msra.mxu0 0.0
      %464 = vmatpush.msra.mxu0 %v434
      %465 = vmatmul.f32.gmra.mxu0 %v438
      %v466 = vpop.f32.mrf.mxu0
      %v467 = vadd.f32 0.0, %v466
      %468 = vmatmul.f32.gmra.mxu0 %v441
      %v469 = vpop.f32.mrf.mxu0
      %v470 = vadd.f32 0.0, %v469
      %471 = vmatmul.f32.gmra.mxu0 %v444
      %v472 = vpop.f32.mrf.mxu0
      %v473 = vadd.f32 0.0, %v472
      %474 = vmatmul.f32.gmra.mxu0 %v447
      %v475 = vpop.f32.mrf.mxu0
      %v476 = vadd.f32 0.0, %v475
      %477 = vdwg.mxu0
      %478 = vmatpush.msra.mxu0 0.0
      %479 = vmatpush.msra.mxu0 0.0
      %480 = vmatpush.msra.mxu0 0.0
      %481 = vmatpush.msra.mxu0 0.0
      %482 = vmatpush.msra.mxu0 0.0
      %483 = vmatpush.msra.mxu0 0.0
      %484 = vmatpush.msra.mxu0 0.0
      %485 = vmatpush.msra.mxu0 0.0
      %486 = vmatpush.msra.mxu0 0.0
      %487 = vmatpush.msra.mxu0 0.0
      %488 = vmatpush.msra.mxu0 0.0
      %489 = vmatpush.msra.mxu0 0.0
      %490 = vmatpush.msra.mxu0 0.0
      %491 = vmatpush.msra.mxu0 0.0
      %492 = vmatpush.msra.mxu0 0.0
      %493 = vmatpush.msra.mxu0 %v432
      %494 = vmatmul.f32.gmra.mxu0 %v438
      %v495 = vpop.f32.mrf.mxu0
      %v496 = vadd.f32 0.0, %v495
      %497 = vmatmul.f32.gmra.mxu0 %v441
      %v498 = vpop.f32.mrf.mxu0
      %v499 = vadd.f32 0.0, %v498
      %500 = vmatmul.f32.gmra.mxu0 %v444
      %v501 = vpop.f32.mrf.mxu0
      %v502 = vadd.f32 0.0, %v501
      %503 = vmatmul.f32.gmra.mxu0 %v447
      %v504 = vpop.f32.mrf.mxu0
      %v505 = vadd.f32 0.0, %v504
      %506 = vdwg.mxu0
      %v507 = vadd.f32 %v416, %v467
      %v508 = vadd.f32 %v417, %v496
      %v509 = vadd.f32 %v418, %v470
      %v510 = vadd.f32 %v419, %v499
      %v511 = vadd.f32 %v420, %v473
      %v512 = vadd.f32 %v421, %v502
      %v513 = vadd.f32 %v422, %v476
      %v514 = vadd.f32 %v423, %v505
      %s515 = scalar_lea.vmem %s1, 128
      %v516 = vld [vmem:[%s515] sm:$0xff]
      %v517 = vld [vmem:[%s515 + $0x8] sm:$0xff]
      %v518 = vld [vmem:[%s515 + $0x10] sm:$0xff]
      %v519 = vld [vmem:[%s515 + $0x18] sm:$0xff]
      %520 = vrot.lane.b32.xlu0 %v171, 111
      %v521 = vpop.permute.xlu0 %520
      %522 = vrot.lane.b32.xlu0 %v172, 111
      %v523 = vpop.permute.xlu0 %522
      %vm524 = vcmask 908288
      %v525 = vsel %vm524, %v521, %v523
      %v529 = vsel %vm192, %v516, 0
      %v532 = vsel %vm192, %v517, 0
      %v535 = vsel %vm192, %v518, 0
      %v538 = vsel %vm192, %v519, 0
      %540 = vmatpush.msra.mxu0 0.0
      %541 = vmatpush.msra.mxu0 0.0
      %542 = vmatpush.msra.mxu0 0.0
      %543 = vmatpush.msra.mxu0 0.0
      %544 = vmatpush.msra.mxu0 0.0
      %545 = vmatpush.msra.mxu0 0.0
      %546 = vmatpush.msra.mxu0 0.0
      %547 = vmatpush.msra.mxu0 0.0
      %548 = vmatpush.msra.mxu0 0.0
      %549 = vmatpush.msra.mxu0 0.0
      %550 = vmatpush.msra.mxu0 0.0
      %551 = vmatpush.msra.mxu0 0.0
      %552 = vmatpush.msra.mxu0 0.0
      %553 = vmatpush.msra.mxu0 0.0
      %554 = vmatpush.msra.mxu0 0.0
      %555 = vmatpush.msra.mxu0 %v525
      %556 = vmatmul.f32.gmra.mxu0 %v529
      %v557 = vpop.f32.mrf.mxu0
      %v558 = vadd.f32 0.0, %v557
      %559 = vmatmul.f32.gmra.mxu0 %v532
      %v560 = vpop.f32.mrf.mxu0
      %v561 = vadd.f32 0.0, %v560
      %562 = vmatmul.f32.gmra.mxu0 %v535
      %v563 = vpop.f32.mrf.mxu0
      %v564 = vadd.f32 0.0, %v563
      %565 = vmatmul.f32.gmra.mxu0 %v538
      %v566 = vpop.f32.mrf.mxu0
      %v567 = vadd.f32 0.0, %v566
      %568 = vdwg.mxu0
      %569 = vmatpush.msra.mxu0 0.0
      %570 = vmatpush.msra.mxu0 0.0
      %571 = vmatpush.msra.mxu0 0.0
      %572 = vmatpush.msra.mxu0 0.0
      %573 = vmatpush.msra.mxu0 0.0
      %574 = vmatpush.msra.mxu0 0.0
      %575 = vmatpush.msra.mxu0 0.0
      %576 = vmatpush.msra.mxu0 0.0
      %577 = vmatpush.msra.mxu0 0.0
      %578 = vmatpush.msra.mxu0 0.0
      %579 = vmatpush.msra.mxu0 0.0
      %580 = vmatpush.msra.mxu0 0.0
      %581 = vmatpush.msra.mxu0 0.0
      %582 = vmatpush.msra.mxu0 0.0
      %583 = vmatpush.msra.mxu0 0.0
      %584 = vmatpush.msra.mxu0 %v523
      %585 = vmatmul.f32.gmra.mxu0 %v529
      %v586 = vpop.f32.mrf.mxu0
      %v587 = vadd.f32 0.0, %v586
      %588 = vmatmul.f32.gmra.mxu0 %v532
      %v589 = vpop.f32.mrf.mxu0
      %v590 = vadd.f32 0.0, %v589
      %591 = vmatmul.f32.gmra.mxu0 %v535
      %v592 = vpop.f32.mrf.mxu0
      %v593 = vadd.f32 0.0, %v592
      %594 = vmatmul.f32.gmra.mxu0 %v538
      %v595 = vpop.f32.mrf.mxu0
      %v596 = vadd.f32 0.0, %v595
      %597 = vdwg.mxu0
      %v598 = vadd.f32 %v507, %v558
      %v599 = vadd.f32 %v508, %v587
      %v600 = vadd.f32 %v509, %v561
      %v601 = vadd.f32 %v510, %v590
      %v602 = vadd.f32 %v511, %v564
      %v603 = vadd.f32 %v512, %v593
      %v604 = vadd.f32 %v513, %v567
      %v605 = vadd.f32 %v514, %v596
      %s606 = scalar_lea.vmem %s1, 160
      %v607 = vld [vmem:[%s606] sm:$0xff]
      %v608 = vld [vmem:[%s606 + $0x8] sm:$0xff]
      %v609 = vld [vmem:[%s606 + $0x10] sm:$0xff]
      %v610 = vld [vmem:[%s606 + $0x18] sm:$0xff]
      %611 = vrot.lane.b32.xlu0 %v171, 110
      %v612 = vpop.permute.xlu0 %611
      %613 = vrot.lane.b32.xlu0 %v172, 110
      %v614 = vpop.permute.xlu0 %613
      %vm615 = vcmask 900096
      %v616 = vsel %vm615, %v612, %v614
      %v620 = vsel %vm192, %v607, 0
      %v623 = vsel %vm192, %v608, 0
      %v626 = vsel %vm192, %v609, 0
      %v629 = vsel %vm192, %v610, 0
      %631 = vmatpush.msra.mxu0 0.0
      %632 = vmatpush.msra.mxu0 0.0
      %633 = vmatpush.msra.mxu0 0.0
      %634 = vmatpush.msra.mxu0 0.0
      %635 = vmatpush.msra.mxu0 0.0
      %636 = vmatpush.msra.mxu0 0.0
      %637 = vmatpush.msra.mxu0 0.0
      %638 = vmatpush.msra.mxu0 0.0
      %639 = vmatpush.msra.mxu0 0.0
      %640 = vmatpush.msra.mxu0 0.0
      %641 = vmatpush.msra.mxu0 0.0
      %642 = vmatpush.msra.mxu0 0.0
      %643 = vmatpush.msra.mxu0 0.0
      %644 = vmatpush.msra.mxu0 0.0
      %645 = vmatpush.msra.mxu0 0.0
      %646 = vmatpush.msra.mxu0 %v616
      %647 = vmatmul.f32.gmra.mxu0 %v620
      %v648 = vpop.f32.mrf.mxu0
      %v649 = vadd.f32 0.0, %v648
      %650 = vmatmul.f32.gmra.mxu0 %v623
      %v651 = vpop.f32.mrf.mxu0
      %v652 = vadd.f32 0.0, %v651
      %653 = vmatmul.f32.gmra.mxu0 %v626
      %v654 = vpop.f32.mrf.mxu0
      %v655 = vadd.f32 0.0, %v654
      %656 = vmatmul.f32.gmra.mxu0 %v629
      %v657 = vpop.f32.mrf.mxu0
      %v658 = vadd.f32 0.0, %v657
      %659 = vdwg.mxu0
      %660 = vmatpush.msra.mxu0 0.0
      %661 = vmatpush.msra.mxu0 0.0
      %662 = vmatpush.msra.mxu0 0.0
      %663 = vmatpush.msra.mxu0 0.0
      %664 = vmatpush.msra.mxu0 0.0
      %665 = vmatpush.msra.mxu0 0.0
      %666 = vmatpush.msra.mxu0 0.0
      %667 = vmatpush.msra.mxu0 0.0
      %668 = vmatpush.msra.mxu0 0.0
      %669 = vmatpush.msra.mxu0 0.0
      %670 = vmatpush.msra.mxu0 0.0
      %671 = vmatpush.msra.mxu0 0.0
      %672 = vmatpush.msra.mxu0 0.0
      %673 = vmatpush.msra.mxu0 0.0
      %674 = vmatpush.msra.mxu0 0.0
      %675 = vmatpush.msra.mxu0 %v614
      %676 = vmatmul.f32.gmra.mxu0 %v620
      %v677 = vpop.f32.mrf.mxu0
      %v678 = vadd.f32 0.0, %v677
      %679 = vmatmul.f32.gmra.mxu0 %v623
      %v680 = vpop.f32.mrf.mxu0
      %v681 = vadd.f32 0.0, %v680
      %682 = vmatmul.f32.gmra.mxu0 %v626
      %v683 = vpop.f32.mrf.mxu0
      %v684 = vadd.f32 0.0, %v683
      %685 = vmatmul.f32.gmra.mxu0 %v629
      %v686 = vpop.f32.mrf.mxu0
      %v687 = vadd.f32 0.0, %v686
      %688 = vdwg.mxu0
      %v689 = vadd.f32 %v598, %v649
      %v690 = vadd.f32 %v599, %v678
      %v691 = vadd.f32 %v600, %v652
      %v692 = vadd.f32 %v601, %v681
      %v693 = vadd.f32 %v602, %v655
      %v694 = vadd.f32 %v603, %v684
      %v695 = vadd.f32 %v604, %v658
      %v696 = vadd.f32 %v605, %v687
      %s697 = scalar_lea.vmem %s1, 192
      %v698 = vld [vmem:[%s697] sm:$0xff]
      %v699 = vld [vmem:[%s697 + $0x8] sm:$0xff]
      %v700 = vld [vmem:[%s697 + $0x10] sm:$0xff]
      %v701 = vld [vmem:[%s697 + $0x18] sm:$0xff]
      %702 = vrot.lane.b32.xlu0 %v171, 96
      %v703 = vpop.permute.xlu0 %702
      %704 = vrot.lane.b32.xlu0 %v172, 96
      %v705 = vpop.permute.xlu0 %704
      %vm706 = vcmask 785408
      %v707 = vsel %vm706, %v703, %v705
      %v711 = vsel %vm192, %v698, 0
      %v714 = vsel %vm192, %v699, 0
      %v717 = vsel %vm192, %v700, 0
      %v720 = vsel %vm192, %v701, 0
      %722 = vmatpush.msra.mxu0 0.0
      %723 = vmatpush.msra.mxu0 0.0
      %724 = vmatpush.msra.mxu0 0.0
      %725 = vmatpush.msra.mxu0 0.0
      %726 = vmatpush.msra.mxu0 0.0
      %727 = vmatpush.msra.mxu0 0.0
      %728 = vmatpush.msra.mxu0 0.0
      %729 = vmatpush.msra.mxu0 0.0
      %730 = vmatpush.msra.mxu0 0.0
      %731 = vmatpush.msra.mxu0 0.0
      %732 = vmatpush.msra.mxu0 0.0
      %733 = vmatpush.msra.mxu0 0.0
      %734 = vmatpush.msra.mxu0 0.0
      %735 = vmatpush.msra.mxu0 0.0
      %736 = vmatpush.msra.mxu0 0.0
      %737 = vmatpush.msra.mxu0 %v707
      %738 = vmatmul.f32.gmra.mxu0 %v711
      %v739 = vpop.f32.mrf.mxu0
      %v740 = vadd.f32 0.0, %v739
      %741 = vmatmul.f32.gmra.mxu0 %v714
      %v742 = vpop.f32.mrf.mxu0
      %v743 = vadd.f32 0.0, %v742
      %744 = vmatmul.f32.gmra.mxu0 %v717
      %v745 = vpop.f32.mrf.mxu0
      %v746 = vadd.f32 0.0, %v745
      %747 = vmatmul.f32.gmra.mxu0 %v720
      %v748 = vpop.f32.mrf.mxu0
      %v749 = vadd.f32 0.0, %v748
      %750 = vdwg.mxu0
      %751 = vmatpush.msra.mxu0 0.0
      %752 = vmatpush.msra.mxu0 0.0
      %753 = vmatpush.msra.mxu0 0.0
      %754 = vmatpush.msra.mxu0 0.0
      %755 = vmatpush.msra.mxu0 0.0
      %756 = vmatpush.msra.mxu0 0.0
      %757 = vmatpush.msra.mxu0 0.0
      %758 = vmatpush.msra.mxu0 0.0
      %759 = vmatpush.msra.mxu0 0.0
      %760 = vmatpush.msra.mxu0 0.0
      %761 = vmatpush.msra.mxu0 0.0
      %762 = vmatpush.msra.mxu0 0.0
      %763 = vmatpush.msra.mxu0 0.0
      %764 = vmatpush.msra.mxu0 0.0
      %765 = vmatpush.msra.mxu0 0.0
      %766 = vmatpush.msra.mxu0 %v705
      %767 = vmatmul.f32.gmra.mxu0 %v711
      %v768 = vpop.f32.mrf.mxu0
      %v769 = vadd.f32 0.0, %v768
      %770 = vmatmul.f32.gmra.mxu0 %v714
      %v771 = vpop.f32.mrf.mxu0
      %v772 = vadd.f32 0.0, %v771
      %773 = vmatmul.f32.gmra.mxu0 %v717
      %v774 = vpop.f32.mrf.mxu0
      %v775 = vadd.f32 0.0, %v774
      %776 = vmatmul.f32.gmra.mxu0 %v720
      %v777 = vpop.f32.mrf.mxu0
      %v778 = vadd.f32 0.0, %v777
      %779 = vdwg.mxu0
      %v780 = vadd.f32 %v689, %v740
      %v781 = vadd.f32 %v690, %v769
      %v782 = vadd.f32 %v691, %v743
      %v783 = vadd.f32 %v692, %v772
      %v784 = vadd.f32 %v693, %v746
      %v785 = vadd.f32 %v694, %v775
      %v786 = vadd.f32 %v695, %v749
      %v787 = vadd.f32 %v696, %v778
      %s788 = scalar_lea.vmem %s1, 224
      %v789 = vld [vmem:[%s788] sm:$0xff]
      %v790 = vld [vmem:[%s788 + $0x8] sm:$0xff]
      %v791 = vld [vmem:[%s788 + $0x10] sm:$0xff]
      %v792 = vld [vmem:[%s788 + $0x18] sm:$0xff]
      %793 = vrot.lane.b32.xlu0 %v171, 95
      %v794 = vpop.permute.xlu0 %793
      %795 = vrot.lane.b32.xlu0 %v172, 95
      %v796 = vpop.permute.xlu0 %795
      %vm797 = vcmask 777216
      %v798 = vsel %vm797, %v794, %v796
      %v802 = vsel %vm192, %v789, 0
      %v805 = vsel %vm192, %v790, 0
      %v808 = vsel %vm192, %v791, 0
      %v811 = vsel %vm192, %v792, 0
      %813 = vmatpush.msra.mxu0 0.0
      %814 = vmatpush.msra.mxu0 0.0
      %815 = vmatpush.msra.mxu0 0.0
      %816 = vmatpush.msra.mxu0 0.0
      %817 = vmatpush.msra.mxu0 0.0
      %818 = vmatpush.msra.mxu0 0.0
      %819 = vmatpush.msra.mxu0 0.0
      %820 = vmatpush.msra.mxu0 0.0
      %821 = vmatpush.msra.mxu0 0.0
      %822 = vmatpush.msra.mxu0 0.0
      %823 = vmatpush.msra.mxu0 0.0
      %824 = vmatpush.msra.mxu0 0.0
      %825 = vmatpush.msra.mxu0 0.0
      %826 = vmatpush.msra.mxu0 0.0
      %827 = vmatpush.msra.mxu0 0.0
      %828 = vmatpush.msra.mxu0 %v798
      %829 = vmatmul.f32.gmra.mxu0 %v802
      %v830 = vpop.f32.mrf.mxu0
      %v831 = vadd.f32 0.0, %v830
      %832 = vmatmul.f32.gmra.mxu0 %v805
      %v833 = vpop.f32.mrf.mxu0
      %v834 = vadd.f32 0.0, %v833
      %835 = vmatmul.f32.gmra.mxu0 %v808
      %v836 = vpop.f32.mrf.mxu0
      %v837 = vadd.f32 0.0, %v836
      %838 = vmatmul.f32.gmra.mxu0 %v811
      %v839 = vpop.f32.mrf.mxu0
      %v840 = vadd.f32 0.0, %v839
      %841 = vdwg.mxu0
      %842 = vmatpush.msra.mxu0 0.0
      %843 = vmatpush.msra.mxu0 0.0
      %844 = vmatpush.msra.mxu0 0.0
      %845 = vmatpush.msra.mxu0 0.0
      %846 = vmatpush.msra.mxu0 0.0
      %847 = vmatpush.msra.mxu0 0.0
      %848 = vmatpush.msra.mxu0 0.0
      %849 = vmatpush.msra.mxu0 0.0
      %850 = vmatpush.msra.mxu0 0.0
      %851 = vmatpush.msra.mxu0 0.0
      %852 = vmatpush.msra.mxu0 0.0
      %853 = vmatpush.msra.mxu0 0.0
      %854 = vmatpush.msra.mxu0 0.0
      %855 = vmatpush.msra.mxu0 0.0
      %856 = vmatpush.msra.mxu0 0.0
      %857 = vmatpush.msra.mxu0 %v796
      %858 = vmatmul.f32.gmra.mxu0 %v802
      %v859 = vpop.f32.mrf.mxu0
      %v860 = vadd.f32 0.0, %v859
      %861 = vmatmul.f32.gmra.mxu0 %v805
      %v862 = vpop.f32.mrf.mxu0
      %v863 = vadd.f32 0.0, %v862
      %864 = vmatmul.f32.gmra.mxu0 %v808
      %v865 = vpop.f32.mrf.mxu0
      %v866 = vadd.f32 0.0, %v865
      %867 = vmatmul.f32.gmra.mxu0 %v811
      %v868 = vpop.f32.mrf.mxu0
      %v869 = vadd.f32 0.0, %v868
      %870 = vdwg.mxu0
      %v871 = vadd.f32 %v780, %v831
      %v872 = vadd.f32 %v781, %v860
      %v873 = vadd.f32 %v782, %v834
      %v874 = vadd.f32 %v783, %v863
      %v875 = vadd.f32 %v784, %v837
      %v876 = vadd.f32 %v785, %v866
      %v877 = vadd.f32 %v786, %v840
      %v878 = vadd.f32 %v787, %v869
      %s879 = scalar_lea.vmem %s1, 256
      %v880 = vld [vmem:[%s879] sm:$0xff]
      %v881 = vld [vmem:[%s879 + $0x8] sm:$0xff]
      %v882 = vld [vmem:[%s879 + $0x10] sm:$0xff]
      %v883 = vld [vmem:[%s879 + $0x18] sm:$0xff]
      %884 = vrot.lane.b32.xlu0 %v171, 94
      %v885 = vpop.permute.xlu0 %884
      %886 = vrot.lane.b32.xlu0 %v172, 94
      %v887 = vpop.permute.xlu0 %886
      %vm888 = vcmask 769024
      %v889 = vsel %vm888, %v885, %v887
      %v893 = vsel %vm192, %v880, 0
      %v896 = vsel %vm192, %v881, 0
      %v899 = vsel %vm192, %v882, 0
      %v902 = vsel %vm192, %v883, 0
      %904 = vmatpush.msra.mxu0 0.0
      %905 = vmatpush.msra.mxu0 0.0
      %906 = vmatpush.msra.mxu0 0.0
      %907 = vmatpush.msra.mxu0 0.0
      %908 = vmatpush.msra.mxu0 0.0
      %909 = vmatpush.msra.mxu0 0.0
      %910 = vmatpush.msra.mxu0 0.0
      %911 = vmatpush.msra.mxu0 0.0
      %912 = vmatpush.msra.mxu0 0.0
      %913 = vmatpush.msra.mxu0 0.0
      %914 = vmatpush.msra.mxu0 0.0
      %915 = vmatpush.msra.mxu0 0.0
      %916 = vmatpush.msra.mxu0 0.0
      %917 = vmatpush.msra.mxu0 0.0
      %918 = vmatpush.msra.mxu0 0.0
      %919 = vmatpush.msra.mxu0 %v889
      %920 = vmatmul.f32.gmra.mxu0 %v893
      %v921 = vpop.f32.mrf.mxu0
      %v922 = vadd.f32 0.0, %v921
      %923 = vmatmul.f32.gmra.mxu0 %v896
      %v924 = vpop.f32.mrf.mxu0
      %v925 = vadd.f32 0.0, %v924
      %926 = vmatmul.f32.gmra.mxu0 %v899
      %v927 = vpop.f32.mrf.mxu0
      %v928 = vadd.f32 0.0, %v927
      %929 = vmatmul.f32.gmra.mxu0 %v902
      %v930 = vpop.f32.mrf.mxu0
      %v931 = vadd.f32 0.0, %v930
      %932 = vdwg.mxu0
      %933 = vmatpush.msra.mxu0 0.0
      %934 = vmatpush.msra.mxu0 0.0
      %935 = vmatpush.msra.mxu0 0.0
      %936 = vmatpush.msra.mxu0 0.0
      %937 = vmatpush.msra.mxu0 0.0
      %938 = vmatpush.msra.mxu0 0.0
      %939 = vmatpush.msra.mxu0 0.0
      %940 = vmatpush.msra.mxu0 0.0
      %941 = vmatpush.msra.mxu0 0.0
      %942 = vmatpush.msra.mxu0 0.0
      %943 = vmatpush.msra.mxu0 0.0
      %944 = vmatpush.msra.mxu0 0.0
      %945 = vmatpush.msra.mxu0 0.0
      %946 = vmatpush.msra.mxu0 0.0
      %947 = vmatpush.msra.mxu0 0.0
      %948 = vmatpush.msra.mxu0 %v887
      %949 = vmatmul.f32.gmra.mxu0 %v893
      %v950 = vpop.f32.mrf.mxu0
      %v951 = vadd.f32 0.0, %v950
      %952 = vmatmul.f32.gmra.mxu0 %v896
      %v953 = vpop.f32.mrf.mxu0
      %v954 = vadd.f32 0.0, %v953
      %955 = vmatmul.f32.gmra.mxu0 %v899
      %v956 = vpop.f32.mrf.mxu0
      %v957 = vadd.f32 0.0, %v956
      %958 = vmatmul.f32.gmra.mxu0 %v902
      %v959 = vpop.f32.mrf.mxu0
      %v960 = vadd.f32 0.0, %v959
      %961 = vdwg.mxu0
      %v962 = vadd.f32 %v871, %v922
      %v963 = vadd.f32 %v872, %v951
      %v964 = vadd.f32 %v873, %v925
      %v965 = vadd.f32 %v874, %v954
      %v966 = vadd.f32 %v875, %v928
      %v967 = vadd.f32 %v876, %v957
      %v968 = vadd.f32 %v877, %v931
      %v969 = vadd.f32 %v878, %v960
      %v970 = vld [vmem:[%s2] sm:$0xff]
      %v971 = vld [vmem:[%s2 + $0x8] sm:$0xff]
      %v972 = vld [vmem:[%s2 + $0x10] sm:$0xff]
      %v973 = vld [vmem:[%s2 + $0x18] sm:$0xff]
      %975 = vset.pattern.permute.xlu0 0
      %976 = vperm.xlu0 %975, %v970
      %v977 = vpop.permute.xlu0 %976
      %980 = vset.pattern.permute.xlu0 0
      %981 = vperm.xlu0 %980, %v971
      %v982 = vpop.permute.xlu0 %981
      %985 = vset.pattern.permute.xlu0 0
      %986 = vperm.xlu0 %985, %v972
      %v987 = vpop.permute.xlu0 %986
      %990 = vset.pattern.permute.xlu0 0
      %991 = vperm.xlu0 %990, %v973
      %v992 = vpop.permute.xlu0 %991
      %v994 = vadd.f32 %v962, %v977
      %v995 = vadd.f32 %v963, %v977
      %v996 = vadd.f32 %v964, %v982
      %v997 = vadd.f32 %v965, %v982
      %v998 = vadd.f32 %v966, %v987
      %v999 = vadd.f32 %v967, %v987
      %v1000 = vadd.f32 %v968, %v992
      %v1001 = vadd.f32 %v969, %v992
      %1002 = vst [vmem:[%s170] sm:$0xff] %v994
      %1003 = vst.msk [vmem:[%s170 + $0x8] sm:$0xff] %vm888, %v995
      %1004 = vst [vmem:[%s170 + $0x10] sm:$0xff] %v996
      %1005 = vst.msk [vmem:[%s170 + $0x18] sm:$0xff] %vm888, %v997
      %1006 = vst [vmem:[%s170 + $0x20] sm:$0xff] %v998
      %1007 = vst.msk [vmem:[%s170 + $0x28] sm:$0xff] %vm888, %v999
      %1008 = vst [vmem:[%s170 + $0x30] sm:$0xff] %v1000
      %1009 = vst.msk [vmem:[%s170 + $0x38] sm:$0xff] %vm888, %v1001
      %p1010 = scmp.lt.s32.totalorder %s14, 1
      %s1011 = scalar_select %p1010, %s14, 1
      %s1012 = smul.addr %s1011, 8
      %s1013 = smul.addr %s1012, 8
      %s1014 = scalar_lea.vmem %s3, %s1013
      // Predicated region
      $region33: #{fool_conv2d.1} parent=31 // pred_check
        %p1015 = pneg %p100
      $region34: #{fool_conv2d.1} parent=31 // pred_check_branch
        %1017 = sbr.rel (%p1015) target = $region36
      $region35: #{fool_conv2d.1} parent=31 // pred_region
        _
      $region36: #{fool_conv2d.1} parent=31 // pred_fallthru
        _
    $region32: #{fool_conv2d.1} parent=5 // pred_fallthru
      _
    %p1018 = scmp.le.s32.totalorder 2, %s9
    // Predicated region
    $region37: #{fool_conv2d.1} parent=5 // pred_check
      %p1019 = pneg %p1018
    $region38: #{fool_conv2d.1} parent=5 // pred_check_branch
      %1021 = sbr.rel (%p1019) target = $region40
    $region39: #{fool_conv2d.1} parent=5 // pred_region
      %s1022 = ssub.s32 %s9, 2
      // Predicated region
      $region41: #{fool_conv2d.1} parent=39 // pred_check
        %p1023 = pneg %p106
      $region42: #{fool_conv2d.1} parent=39 // pred_check_branch
        %1025 = sbr.rel (%p1023) target = $region44
      $region43: #{fool_conv2d.1} parent=39 // pred_region
        %p1026 = scmp.lt.s32.totalorder %s15, 1
        %s1027 = scalar_select %p1026, %s15, 1
        %s1028 = smul.addr %s1027, 8
        %s1029 = smul.addr %s1028, 8
        %s1030 = scalar_lea.vmem %s3, %s1029
      $region44: #{fool_conv2d.1} parent=39 // pred_fallthru
        _
    $region40: #{fool_conv2d.1} parent=5 // pred_fallthru
      _
  $region6: #{fool_conv2d.1} parent=0 // loop_footer
    %s13 = sadd.s32 1, %s9
  $region7: #{fool_conv2d.1} parent=0 // loop_footer_branch
    %8 = sbr.rel target = $region3
  $region8: #{fool_conv2d.1} parent=0 // loop_exit
    _

</llo_original>
